<compile_context>
chip_gen: v7x
topology: tpu7x:2x2x1
jax: 0.10.0
libtpu: 0.0.40
codegen_flags: <defaults>
</compile_context>

<pallas_src>
import functools

import jax
import jax.numpy as jnp
import numpy as np
from jax.experimental import pallas as pl
from jax.experimental.pallas import tpu as pltpu


def _choose_spatial_tile(p, max_tile=2048):
    """Largest lane tile that divides p and is a multiple of 128 (else full p)."""
    if p % 128 != 0:
        return p
    tp = 128
    while tp * 2 <= max_tile and p % (tp * 2) == 0:
        tp *= 2
    return tp


def _teacher_sum_kernel(t_ref, sum_ref):
    """Pass 1: accumulate per-channel spatial sums of the teacher per batch."""
    pt = pl.program_id(1)

    @pl.when(pt == 0)
    def _():
        sum_ref[...] = jnp.zeros_like(sum_ref)

    ch_sum = jnp.sum(t_ref[...].astype(jnp.float32), axis=-1, keepdims=True)  # (C, 1)
    sum_ref[...] += ch_sum  # lane-broadcast; wrapper reads lane 0


def _kd_kernel(w_ref, p_ref, s_ref, t_ref, kl_ref, mse_ref, *, mid, inv_temp):
    """Pass 2: fused KL + spatial-attention MSE partial sums for one tile."""
    pt = pl.program_id(1)

    @pl.when(pt == 0)
    def _():
        kl_ref[...] = jnp.zeros_like(kl_ref)
        mse_ref[...] = jnp.zeros_like(mse_ref)

    s = s_ref[...].astype(jnp.float32)  # (C, tp)  student tile
    t = t_ref[...].astype(jnp.float32)  # (C, tp)  teacher tile

    # ---- KL( softmax(t/T) || softmax(s/T) ), channel axis = 0 (sublanes) ----
    s_l = s * inv_temp
    t_l = t * inv_temp
    s_max = jnp.max(s_l, axis=0, keepdims=True)
    s_lse = jnp.log(jnp.sum(jnp.exp(s_l - s_max), axis=0, keepdims=True)) + s_max
    t_max = jnp.max(t_l, axis=0, keepdims=True)
    t_exp = jnp.exp(t_l - t_max)
    t_sum = jnp.sum(t_exp, axis=0, keepdims=True)
    t_lse = jnp.log(t_sum) + t_max
    p_t = t_exp * pl.reciprocal(t_sum, approx=True)
    kl_tile = jnp.sum(p_t * ((t_l - t_lse) - (s_l - s_lse)))

    # ---- spatial attention gates (mid unrolled: scalar-broadcast FMAs) ----
    w = w_ref[0]                                    # scalar `weight` (SMEM)
    xm_s = jnp.mean(s, axis=0, keepdims=True) * w   # (1, tp) = mean_c(s*weight)
    xm_t = jnp.mean(t, axis=0, keepdims=True)       # (1, tp)

    def gate(xm, base):
        # params layout per attention: w1[0:mid], b1[mid:2mid], w2[2mid:3mid], b2
        z = p_ref[base + 3 * mid]
        for k in range(mid):
            h = jnp.maximum(xm * p_ref[base + k] + p_ref[base + mid + k], 0.0)
            z = z + h * p_ref[base + 2 * mid + k]
        return pl.reciprocal(1.0 + jnp.exp(-z), approx=True)  # sigmoid

    a_s = gate(xm_s, 0)
    a_t = gate(xm_t, 3 * mid + 1)

    diff = (s * w) * a_s - t * a_t
    mse_tile = jnp.sum(diff * diff)

    kl_ref[...] += kl_tile
    mse_ref[...] += mse_tile


def kd_loss_with_attention(inputs, student_outputs, teacher_outputs, params,
                           *, alpha, temperature, reduction="sum"):
    del inputs  # unused by the original forward
    if reduction != "sum":
        raise NotImplementedError("only reduction='sum' is broadcast-valid")
    B, C, H, W = student_outputs.shape
    assert teacher_outputs.shape == student_outputs.shape
    # expand_as requires Attention out_channels = C // 16 == 1 (tested C == 16)
    if C // 16 != 1:
        raise ValueError("channels must satisfy C // 16 == 1 (e.g. C == 16)")
    if C % 8 != 0:
        raise ValueError("channel count must be a multiple of 8 for TPU tiling")

    P = H * W
    T = float(temperature)
    s = student_outputs.reshape(B, C, P)  # free contiguous reshape of NCHW
    t = teacher_outputs.reshape(B, C, P)

    tp = _choose_spatial_tile(P)
    n_pt = P // tp

    w1s, b1s, w2s, b2s, w1t, b1t, w2t, b2t = params
    mid = w1s.shape[-1]
    params_flat = jnp.concatenate(
        [p.reshape(-1).astype(jnp.float32) for p in params])  # (2*(3*mid+1),)

    # ------------- pass 1: teacher per-channel spatial sums -> weight -------
    ch_sums = pl.pallas_call(
        _teacher_sum_kernel,
        out_shape=jax.ShapeDtypeStruct((B, C, 128), jnp.float32),
        grid_spec=pltpu.PrefetchScalarGridSpec(
            num_scalar_prefetch=0,
            grid=(B, n_pt),
            in_specs=[pl.BlockSpec((None, C, tp), lambda b, q: (b, 0, q))],
            out_specs=pl.BlockSpec((None, C, 128), lambda b, q: (b, 0, 0)),
        ),
        compiler_params=pltpu.CompilerParams(
            dimension_semantics=("parallel", "arbitrary")),
    )(t)

    t_mean = ch_sums[:, :, 0] / float(P)                    # (B, C)
    t_pow = t_mean ** int(T) if T.is_integer() else jnp.power(t_mean, T)
    teacher_feature = jnp.mean(jnp.sum(t_pow, axis=-1))     # scalar
    weight = jax.nn.softplus(teacher_feature).astype(jnp.float32).reshape(1)

    # -------- pass 2: fused KL + attention MSE, tiled over (B, spatial) -----
    kernel = functools.partial(_kd_kernel, mid=mid, inv_temp=1.0 / T)
    kl_parts, mse_parts = pl.pallas_call(
        kernel,
        out_shape=(jax.ShapeDtypeStruct((B, 1, 128), jnp.float32),
                   jax.ShapeDtypeStruct((B, 1, 128), jnp.float32)),
        grid_spec=pltpu.PrefetchScalarGridSpec(
            num_scalar_prefetch=0,
            grid=(B, n_pt),
            in_specs=[
                pl.BlockSpec(memory_space=pltpu.MemorySpace.SMEM),  # weight (1,)
                pl.BlockSpec(memory_space=pltpu.MemorySpace.SMEM),  # attn params
                pl.BlockSpec((None, C, tp), lambda b, q: (b, 0, q)),
                pl.BlockSpec((None, C, tp), lambda b, q: (b, 0, q)),
            ],
            out_specs=(
                pl.BlockSpec((None, 1, 128), lambda b, q: (b, 0, 0)),
                pl.BlockSpec((None, 1, 128), lambda b, q: (b, 0, 0)),
            ),
        ),
        compiler_params=pltpu.CompilerParams(
            dimension_semantics=("parallel", "arbitrary")),
    )(weight, params_flat, s, t)

    n_elem = float(B * C * P)
    kl = jnp.sum(kl_parts[:, 0, 0]) * (T * T * float(alpha) / n_elem)
    mse = jnp.sum(mse_parts[:, 0, 0]) / n_elem
    return kl + mse


def make_attention_params(key, channels, reduction=4):
    """1x1-conv params for Attention: conv1 (1 -> C//r), conv2 (C//r -> 1)."""
    mid = channels // reduction
    k1, k2, k3, k4 = jax.random.split(key, 4)
    w1 = jax.random.normal(k1, (1, mid), jnp.float32) * 0.1
    b1 = jax.random.normal(k2, (1, mid), jnp.float32) * 0.1
    w2 = jax.random.normal(k3, (1, mid), jnp.float32) * 0.1
    b2 = jax.random.normal(k4, (1, 1), jnp.float32) * 0.1
    return w1, b1, w2, b2


def reference_loss(student, teacher, params, *, alpha, temperature):
    """Pure-JAX NCHW reference mirroring the PyTorch math."""
    T = float(temperature)
    B, C, H, W = student.shape
    log_p_s = jax.nn.log_softmax(student / T, axis=1)
    p_t = jax.nn.softmax(teacher / T, axis=1)
    kl = jnp.mean(p_t * (jnp.log(p_t) - log_p_s)) * T * T * alpha

    t_mean = teacher.reshape(B, C, -1).mean(axis=2)
    t_pow = t_mean ** int(T) if T.is_integer() else t_mean ** T
    weight = jax.nn.softplus(t_pow.sum(axis=1).mean())

    w1s, b1s, w2s, b2s, w1t, b1t, w2t, b2t = params

    def att(x, w1, b1, w2, b2):
        xm = x.mean(axis=1, keepdims=True)                              # (B,1,H,W)
        y = xm * w1[0][None, :, None, None] + b1[0][None, :, None, None]
        y = jnp.maximum(y, 0.0)
        z = jnp.sum(y * w2[0][None, :, None, None], axis=1) + b2[0, 0]  # (B,H,W)
        a = jax.nn.sigmoid(z)
        return x * a[:, None, :, :]

    s_map = att(student * weight, w1s, b1s, w2s, b2s)
    t_map = att(teacher, w1t, b1t, w2t, b2t)
    return kl + jnp.mean((s_map - t_map) ** 2)


if __name__ == "__main__":
    alpha = 0.5
    temperature = 4.0

    # P = H*W = 4096 -> two 2048-lane spatial tiles; grid = (B=2, 2)
    B, C, H, W = 2, 16, 64, 64
    key = jax.random.PRNGKey(0)
    k_in, k_s, k_t, k_ps, k_pt = jax.random.split(key, 5)
    inputs = jax.random.normal(k_in, (B, C, H, W), jnp.float32)
    student_outputs = jax.random.normal(k_s, (B, C, H, W), jnp.float32)
    teacher_outputs = jax.random.normal(k_t, (B, C, H, W), jnp.float32)

    params_s = make_attention_params(k_ps, C, reduction=4)
    params_t = make_attention_params(k_pt, C, reduction=4)
    params = (*params_s, *params_t)

    loss = kd_loss_with_attention(
        inputs, student_outputs, teacher_outputs, params,
        alpha=alpha, temperature=temperature, reduction="sum")
    loss = jax.block_until_ready(loss)

    ref = reference_loss(student_outputs, teacher_outputs, params,
                         alpha=alpha, temperature=temperature)
    # approx-EUP reciprocals (softmax denom, sigmoid) -> slightly looser rtol
    np.testing.assert_allclose(np.asarray(loss), np.asarray(ref),
                               rtol=5e-3, atol=1e-4)
    print("KERNEL_OK")
</pallas_src>

<mosaic_0001>
module attributes {stable_mosaic.version = 11 : i64} {
  func.func @_teacher_sum_kernel(%arg0: i32, %arg1: i32, %arg2: memref<1x16x2048xf32, #tpu.memory_space<vmem>>, %arg3: memref<1x16x128xf32, #tpu.memory_space<vmem>>) attributes {dimension_semantics = [#tpu.dimension_semantics<parallel>, #tpu.dimension_semantics<arbitrary>], iteration_bounds = array<i64: 2, 2>, scalar_prefetch = 0 : i64, scratch_operands = 0 : i64, tpu.core_type = #tpu.core_type<tc>, window_params = [{transform_indices = @transform_0, window_bounds = array<i64: 1, 16, 2048>}, {transform_indices = @transform_1, window_bounds = array<i64: 1, 16, 128>}]} {
    %c0_i32 = arith.constant 0 : i32
    %0 = arith.cmpi eq, %arg1, %c0_i32 : i32
    %1 = arith.extui %0 : i1 to i32
    %c0_i32_0 = arith.constant 0 : i32
    %2 = arith.cmpi ne, %1, %c0_i32_0 : i32
    scf.if %2 {
      %cst_9 = arith.constant 0.000000e+00 : f32
      %14 = vector.broadcast %cst_9 : f32 to vector<16x128xf32>
      %c0_10 = arith.constant 0 : index
      %c0_11 = arith.constant 0 : index
      %c0_12 = arith.constant 0 : index
      %15 = vector.load %arg3[%c0_10, %c0_11, %c0_12] : memref<1x16x128xf32, #tpu.memory_space<vmem>>, vector<1x16x128xf32>
      %16 = vector.shape_cast %15 : vector<1x16x128xf32> to vector<16x128xf32>
      %17 = vector.shape_cast %14 : vector<16x128xf32> to vector<1x16x128xf32>
      tpu.vector_store %arg3[%c0_10, %c0_11, %c0_12], %17 {strides = array<i32>} : memref<1x16x128xf32, #tpu.memory_space<vmem>>, vector<1x16x128xf32>,
    } else {
    }
    %c0 = arith.constant 0 : index
    %c0_1 = arith.constant 0 : index
    %c0_2 = arith.constant 0 : index
    %3 = vector.load %arg2[%c0, %c0_1, %c0_2] : memref<1x16x2048xf32, #tpu.memory_space<vmem>>, vector<1x16x2048xf32>
    %4 = vector.shape_cast %3 : vector<1x16x2048xf32> to vector<16x2048xf32>
    %cst = arith.constant dense<0.000000e+00> : vector<16xf32>
    %5 = vector.multi_reduction <add>, %4, %cst [1] : vector<16x2048xf32> to vector<16xf32>
    %6 = vector.shape_cast %5 : vector<16xf32> to vector<16x1xf32>
    %c0_3 = arith.constant 0 : index
    %c0_4 = arith.constant 0 : index
    %c0_5 = arith.constant 0 : index
    %7 = vector.load %arg3[%c0_3, %c0_4, %c0_5] : memref<1x16x128xf32, #tpu.memory_space<vmem>>, vector<1x16x128xf32>
    %8 = vector.shape_cast %7 : vector<1x16x128xf32> to vector<16x128xf32>
    %9 = vector.broadcast %6 : vector<16x1xf32> to vector<16x128xf32>
    %10 = arith.addf %8, %9 : vector<16x128xf32>
    %c0_6 = arith.constant 0 : index
    %c0_7 = arith.constant 0 : index
    %c0_8 = arith.constant 0 : index
    %11 = vector.load %arg3[%c0_6, %c0_7, %c0_8] : memref<1x16x128xf32, #tpu.memory_space<vmem>>, vector<1x16x128xf32>
    %12 = vector.shape_cast %11 : vector<1x16x128xf32> to vector<16x128xf32>
    %13 = vector.shape_cast %10 : vector<16x128xf32> to vector<1x16x128xf32>
    tpu.vector_store %arg3[%c0_6, %c0_7, %c0_8], %13 {strides = array<i32>} : memref<1x16x128xf32, #tpu.memory_space<vmem>>, vector<1x16x128xf32>,
    return
  }
  func.func @transform_0(%arg0: i32, %arg1: i32) -> (i32, i32, i32) {
    %c0_i32 = arith.constant 0 : i32
    %c0_i32_0 = arith.constant 0 : i32
    return %arg0, %c0_i32, %arg1 : i32, i32, i32
  }
  func.func @transform_1(%arg0: i32, %arg1: i32) -> (i32, i32, i32) {
    %c0_i32 = arith.constant 0 : i32
    %c0_i32_0 = arith.constant 0 : i32
    %c0_i32_1 = arith.constant 0 : i32
    return %arg0, %c0_i32, %c0_i32_0 : i32, i32, i32
  }
}

</mosaic_0001>

<llo_original>
// kernel: tpu_custom_call.1
$region0: #{tpu_custom_call.1}
  #allocation0 [shape = 'u32[]', space=smem, size = 0x4, offset = 0x4, fixed_abs, tag = 'smem constant byte address 0x4 - core index']
  #allocation1 [shape = 'u32[144,128]{1,0:T(1,128)}', space=vmem, size = 0x12000, scoped, tag = 'internal scratch']
  %s0 = inlined_call_operand.hbm [shape: f32[2,16,4096], index: 0, kind: input, shape index: {}]
  %s1 = inlined_call_operand.hbm [shape: f32[2,16,128], index: 1, kind: output, shape index: {}]
  %s2 = sld [smem:[#allocation0]]
  $region45: #{tpu_custom_call.1} parent=0
    _
  %s4 = ssub.s32 1, %s2
  %s5 = scalar_select 0, %s4, %s2
  $region1: #{tpu_custom_call.1} parent=0
    #allocation2 [shape = 'u8[262144]{0}', space=vmem, size = 0x40000, scoped, tag = 'input window, operand 0']
    #allocation3 [shape = 's32[2]{0}', space=sflag, size = 0x8, scoped, tag = 'scoped memory for tpu_custom_call.1']
    #allocation4 [shape = 's32[2]{0}', space=sflag, size = 0x8, scoped, tag = 'scoped memory for tpu_custom_call.1']
    #allocation5 [shape = 'u8[16384]{0}', space=vmem, size = 0x4000, scoped, tag = 'output window, operand 0']
    %6 = vsyncpa [#allocation3], 0
    %s7 = scalar_lea.sflag [#allocation3], 1
    %8 = vsyncpa %s7, 0
    %9 = vsyncpa [#allocation4], 0
    %s10 = scalar_lea.sflag [#allocation4], 1
    %11 = vsyncpa %s10, 0
    loop: start=0, step=1, limit=6
    $region2: #{tpu_custom_call.1} parent=1 // loop_pre_header
      _
    $region3: #{tpu_custom_call.1} parent=1 // loop_header
      %s13 = sphi 0, %s17
      %p14 = scmp.ge.s32.totalorder %s13, 6
      %s20 = sphi 0, %s32
      %s21 = sphi 0, %s28
      %s22 = sphi 0, %s20
      %s23 = sphi 0, %s21
      %s24 = sphi 0, %s22
      %s25 = sphi 0, %s23
      %s37 = sphi 0, %s39
      %s40 = sphi 0, %s37
      %s41 = sphi 0, %s40
      %s57 = sphi 0, %s41
      %s63 = sphi 0, %s65
      %s66 = sphi 0, %s63
      %s67 = sphi 0, %s66
      %s83 = sphi 0, %s67
    $region4: #{tpu_custom_call.1} parent=1 // loop_header_branch
      %16 = sbr.rel (%p14) target = $region8
    $region5: #{tpu_custom_call.1} parent=1 // loop_body
      %s18 = ssub.s32 %s13, 1
      %s19 = ssub.s32 %s13, 2
      %s26 = sadd.s32 1, %s21
      %p27 = scmp.ge.s32.totalorder %s26, 2
      %s28 = scalar_select %p27, 0, %s26
      %s29 = sadd.s32 1, %s20
      %s30 = scalar_select %p27, %s29, %s20
      %p31 = scmp.ge.s32.totalorder %s30, 2
      %s32 = scalar_select %p31, 0, %s30
      %s33 = ssub.s32 %s20, %s32
      %s34 = ssub.s32 %s21, %s28
      %s35 = sor.u32 %s33, %s34
      %p36 = scmp.eq.s32.totalorder %s35, 0
      %s38 = sadd.s32 %s37, 1
      %s39 = scalar_select %p36, %s37, %s38
      %p42 = pneg %p36
      %p43 = scmp.eq.s32.totalorder %s13, 3
      %p44 = por %p42, %p43
      %p45 = scmp.ne.s32.totalorder %s37, %s40
      %p46 = scmp.eq.s32.totalorder %s13, 0
      %p47 = por %p45, %p46
      %p48 = scmp.ne.s32.totalorder %s37, %s40
      %p49 = scmp.eq.s32.totalorder %s18, 3
      %p50 = por %p48, %p49
      %p51 = scmp.ne.s32.totalorder %s40, %s41
      %p52 = scmp.eq.s32.totalorder %s18, 0
      %p53 = por %p51, %p52
      %p54 = scmp.ne.s32.totalorder %s40, %s41
      %p55 = scmp.eq.s32.totalorder %s19, 3
      %p56 = por %p54, %p55
      %p58 = scmp.ne.s32.totalorder %s41, %s57
      %p59 = scmp.eq.s32.totalorder %s19, 0
      %p60 = por %p58, %p59
      %s61 = ssub.s32 %s20, %s32
      %p62 = scmp.eq.s32.totalorder %s61, 0
      %s64 = sadd.s32 %s63, 1
      %s65 = scalar_select %p62, %s63, %s64
      %p68 = pneg %p62
      %p69 = scmp.eq.s32.totalorder %s13, 3
      %p70 = por %p68, %p69
      %p71 = scmp.ne.s32.totalorder %s63, %s66
      %p72 = scmp.eq.s32.totalorder %s13, 0
      %p73 = por %p71, %p72
      %p74 = scmp.ne.s32.totalorder %s63, %s66
      %p75 = scmp.eq.s32.totalorder %s18, 3
      %p76 = por %p74, %p75
      %p77 = scmp.ne.s32.totalorder %s66, %s67
      %p78 = scmp.eq.s32.totalorder %s18, 0
      %p79 = por %p77, %p78
      %p80 = scmp.ne.s32.totalorder %s66, %s67
      %p81 = scmp.eq.s32.totalorder %s19, 3
      %p82 = por %p80, %p81
      %p84 = scmp.ne.s32.totalorder %s67, %s83
      %p85 = scmp.eq.s32.totalorder %s19, 0
      %p86 = por %p84, %p85
      %p87 = scmp.le.s32.totalorder 1, %s13
      %p88 = scmp.lt.s32.totalorder %s13, 5
      %p89 = pnand %p87, %p88
      %p90 = pneg %p89
      // Predicated region
      $region9: #{tpu_custom_call.1} parent=5 // pred_check
        _
      $region10: #{tpu_custom_call.1} parent=5 // pred_check_branch
        %92 = sbr.rel (%p89) target = $region12
      $region11: #{tpu_custom_call.1} parent=5 // pred_region
        %s93 = ssub.s32 %s13, 1
      $region12: #{tpu_custom_call.1} parent=5 // pred_fallthru
        _
      %p94 = scmp.lt.s32.totalorder %s13, 4
      // Predicated region
      $region13: #{tpu_custom_call.1} parent=5 // pred_check
        %p95 = pneg %p94
      $region14: #{tpu_custom_call.1} parent=5 // pred_check_branch
        %97 = sbr.rel (%p95) target = $region16
      $region15: #{tpu_custom_call.1} parent=5 // pred_region
        // Predicated region
        $region17: #{tpu_custom_call.1} parent=15 // pred_check
          %p98 = pneg %p47
        $region18: #{tpu_custom_call.1} parent=15 // pred_check_branch
          %100 = sbr.rel (%p98) target = $region20
        $region19: #{tpu_custom_call.1} parent=15 // pred_region
          %s101 = sand.u32 %s37, 1
          %s102 = scalar_lea.sflag [#allocation3], %s101
          %s103 = sand.u32 %s37, 1
          %s104 = smul.addr %s103, 256
          %s105 = scalar_lea.vmem [#allocation2], %s104
          %s106 = smul.u32 16, %s21
          %s108 = ssub.s32 4096, 4096
          %109 = vsyncadd %s102, %s108
          %s110 = smul.addr %s20, 64
          %s111 = sadd.s32 %s106, %s110
          %s112 = smul.addr %s111, 128
          %s113 = scalar_lea.hbm %s0, %s112
          %s114 = sshll.u32 %s105, 4
          %s115 = int_to_ptr.vmem [resolvable:$true] %s114
          %120 = dma.hbm_to_vmem [thread:$0]  %s113, 4096, %s115, %s102, 4096, 2048, 128
        $region20: #{tpu_custom_call.1} parent=15 // pred_fallthru
          _
      $region16: #{tpu_custom_call.1} parent=5 // pred_fallthru
        _
      %p121 = scmp.le.s32.totalorder 1, %s13
      %p122 = scmp.lt.s32.totalorder %s13, 5
      %p123 = pnand %p121, %p122
      %p124 = pneg %p123
      // Predicated region
      $region21: #{tpu_custom_call.1} parent=5 // pred_check
        _
      $region22: #{tpu_custom_call.1} parent=5 // pred_check_branch
        %126 = sbr.rel (%p123) target = $region24
      $region23: #{tpu_custom_call.1} parent=5 // pred_region
        %s127 = ssub.s32 %s13, 1
        %s128 = sand.u32 %s40, 1
        %s129 = scalar_lea.sflag [#allocation3], %s128
        %s130 = sand.u32 %s40, 1
        %s131 = smul.addr %s130, 256
        %s132 = scalar_lea.vmem [#allocation2], %s131
        // Predicated region
        $region25: #{tpu_custom_call.1} parent=23 // pred_check
          %p133 = pneg %p53
        $region26: #{tpu_custom_call.1} parent=23 // pred_check_branch
          %135 = sbr.rel (%p133) target = $region28
        $region27: #{tpu_custom_call.1} parent=23 // pred_region
          %136 = dma.done %s129, 4096
        $region28: #{tpu_custom_call.1} parent=23 // pred_fallthru
          _
        %s137 = sand.u32 %s40, 1
        %s138 = scalar_lea.sflag [#allocation3], %s137
        %s139 = sand.u32 %s40, 1
        %s140 = smul.addr %s139, 256
        %s141 = scalar_lea.vmem [#allocation2], %s140
        %p142 = pneg %p53
        %p143 = pneg %p50
        %p144 = pneg %p79
        %p145 = pneg %p76
        %s146 = sand.u32 %s66, 1
        %s147 = scalar_lea.sflag [#allocation4], %s146
        %s148 = sand.u32 %s66, 1
        %s149 = smul.addr %s148, 16
        %s150 = scalar_lea.vmem [#allocation5], %s149
        %s151 = smul.u32 16, %s23
        %p152 = scmp.eq.s32.totalorder %s23, 0
        // Predicated region
        $region29: #{tpu_custom_call.1} parent=23 // pred_check
          %p153 = pneg %p152
        $region30: #{tpu_custom_call.1} parent=23 // pred_check_branch
          %155 = sbr.rel (%p153) target = $region32
        $region31: #{tpu_custom_call.1} parent=23 // pred_region
          %156 = vst [vmem:[%s150] sm:$0xff] 0.0
          %157 = vst [vmem:[%s150 + $0x8] sm:$0xff] 0.0
        $region32: #{tpu_custom_call.1} parent=23 // pred_fallthru
          _
        %v158 = vld [vmem:[%s132] sm:$0xff]
        %v159 = vld [vmem:[%s132 + $0x8] sm:$0xff]
        %v160 = vld [vmem:[%s132 + $0x10] sm:$0xff]
        %v161 = vld [vmem:[%s132 + $0x18] sm:$0xff]
        %v162 = vld [vmem:[%s132 + $0x20] sm:$0xff]
        %v163 = vld [vmem:[%s132 + $0x28] sm:$0xff]
        %v164 = vld [vmem:[%s132 + $0x30] sm:$0xff]
        %v165 = vld [vmem:[%s132 + $0x38] sm:$0xff]
        %v166 = vld [vmem:[%s132 + $0x40] sm:$0xff]
        %v167 = vld [vmem:[%s132 + $0x48] sm:$0xff]
        %v168 = vld [vmem:[%s132 + $0x50] sm:$0xff]
        %v169 = vld [vmem:[%s132 + $0x58] sm:$0xff]
        %v170 = vld [vmem:[%s132 + $0x60] sm:$0xff]
        %v171 = vld [vmem:[%s132 + $0x68] sm:$0xff]
        %v172 = vld [vmem:[%s132 + $0x70] sm:$0xff]
        %v173 = vld [vmem:[%s132 + $0x78] sm:$0xff]
        %v174 = vld [vmem:[%s132 + $0x80] sm:$0xff]
        %v175 = vld [vmem:[%s132 + $0x88] sm:$0xff]
        %v176 = vld [vmem:[%s132 + $0x90] sm:$0xff]
        %v177 = vld [vmem:[%s132 + $0x98] sm:$0xff]
        %v178 = vld [vmem:[%s132 + $0xa0] sm:$0xff]
        %v179 = vld [vmem:[%s132 + $0xa8] sm:$0xff]
        %v180 = vld [vmem:[%s132 + $0xb0] sm:$0xff]
        %v181 = vld [vmem:[%s132 + $0xb8] sm:$0xff]
        %v182 = vld [vmem:[%s132 + $0xc0] sm:$0xff]
        %v183 = vld [vmem:[%s132 + $0xc8] sm:$0xff]
        %v184 = vld [vmem:[%s132 + $0xd0] sm:$0xff]
        %v185 = vld [vmem:[%s132 + $0xd8] sm:$0xff]
        %v186 = vld [vmem:[%s132 + $0xe0] sm:$0xff]
        %v187 = vld [vmem:[%s132 + $0xe8] sm:$0xff]
        %v188 = vld [vmem:[%s132 + $0xf0] sm:$0xff]
        %v189 = vld [vmem:[%s132 + $0xf8] sm:$0xff]
        %v190 = vadd.f32 %v158, %v159
        %v191 = vadd.f32 %v190, %v160
        %v192 = vadd.f32 %v191, %v161
        %v193 = vadd.f32 %v192, %v162
        %v194 = vadd.f32 %v193, %v163
        %v195 = vadd.f32 %v194, %v164
        %v196 = vadd.f32 %v195, %v165
        %v197 = vadd.f32 %v196, %v166
        %v198 = vadd.f32 %v197, %v167
        %v199 = vadd.f32 %v198, %v168
        %v200 = vadd.f32 %v199, %v169
        %v201 = vadd.f32 %v200, %v170
        %v202 = vadd.f32 %v201, %v171
        %v203 = vadd.f32 %v202, %v172
        %v204 = vadd.f32 %v203, %v173
        %205 = vadd.xlane.f32.xlu0 %v204
        %v206 = vpop.xlane.xlu0 %205
        %v207 = vadd.f32 %v174, %v175
        %v208 = vadd.f32 %v207, %v176
        %v209 = vadd.f32 %v208, %v177
        %v210 = vadd.f32 %v209, %v178
        %v211 = vadd.f32 %v210, %v179
        %v212 = vadd.f32 %v211, %v180
        %v213 = vadd.f32 %v212, %v181
        %v214 = vadd.f32 %v213, %v182
        %v215 = vadd.f32 %v214, %v183
        %v216 = vadd.f32 %v215, %v184
        %v217 = vadd.f32 %v216, %v185
        %v218 = vadd.f32 %v217, %v186
        %v219 = vadd.f32 %v218, %v187
        %v220 = vadd.f32 %v219, %v188
        %v221 = vadd.f32 %v220, %v189
        %222 = vadd.xlane.f32.xlu0 %v221
        %v223 = vpop.xlane.xlu0 %222
        %v224 = vld [vmem:[%s150] sm:$0xff]
        %v225 = vld [vmem:[%s150 + $0x8] sm:$0xff]
        %v226 = vadd.f32 %v224, %v206
        %v227 = vadd.f32 %v225, %v223
        %228 = vst [vmem:[%s150] sm:$0xff] %v226
        %229 = vst [vmem:[%s150 + $0x8] sm:$0xff] %v227
        %s230 = sand.u32 %s66, 1
        %s231 = scalar_lea.sflag [#allocation4], %s230
        %s232 = sand.u32 %s66, 1
        %s233 = smul.addr %s232, 16
        %s234 = scalar_lea.vmem [#allocation5], %s233
        // Predicated region
        $region33: #{tpu_custom_call.1} parent=23 // pred_check
          %p235 = pneg %p76
        $region34: #{tpu_custom_call.1} parent=23 // pred_check_branch
          %237 = sbr.rel (%p235) target = $region36
        $region35: #{tpu_custom_call.1} parent=23 // pred_region
          %s239 = ssub.s32 256, 256
          %240 = vsyncadd %s231, %s239
          %s241 = smul.addr %s22, 2
          %s242 = smul.addr %s241, 128
          %s243 = scalar_lea.hbm %s1, %s242
          %s244 = sshll.u32 %s234, 4
          %s245 = int_to_ptr.vmem [resolvable:$true] %s244
          %250 = dma.vmem_to_hbm [thread:$0]  %s245, 256, %s243, %s231, 128, 128, 8
        $region36: #{tpu_custom_call.1} parent=23 // pred_fallthru
          _
      $region24: #{tpu_custom_call.1} parent=5 // pred_fallthru
        _
      %p251 = scmp.le.s32.totalorder 2, %s13
      // Predicated region
      $region37: #{tpu_custom_call.1} parent=5 // pred_check
        %p252 = pneg %p251
      $region38: #{tpu_custom_call.1} parent=5 // pred_check_branch
        %254 = sbr.rel (%p252) target = $region40
      $region39: #{tpu_custom_call.1} parent=5 // pred_region
        %s255 = ssub.s32 %s13, 2
        // Predicated region
        $region41: #{tpu_custom_call.1} parent=39 // pred_check
          %p256 = pneg %p82
        $region42: #{tpu_custom_call.1} parent=39 // pred_check_branch
          %258 = sbr.rel (%p256) target = $region44
        $region43: #{tpu_custom_call.1} parent=39 // pred_region
          %s259 = sand.u32 %s67, 1
          %s260 = scalar_lea.sflag [#allocation4], %s259
          %s261 = sand.u32 %s67, 1
          %s262 = smul.addr %s261, 16
          %s263 = scalar_lea.vmem [#allocation5], %s262
          %264 = dma.done %s260, 256
        $region44: #{tpu_custom_call.1} parent=39 // pred_fallthru
          _
      $region40: #{tpu_custom_call.1} parent=5 // pred_fallthru
        _
    $region6: #{tpu_custom_call.1} parent=1 // loop_footer
      %s17 = sadd.s32 1, %s13
    $region7: #{tpu_custom_call.1} parent=1 // loop_footer_branch
      %12 = sbr.rel target = $region3
    $region8: #{tpu_custom_call.1} parent=1 // loop_exit
      _
    %265 = vsyncpa [#allocation3], 1
    %s266 = scalar_lea.sflag [#allocation3], 1
    %267 = vsyncpa %s266, 1
    %268 = vsyncpa [#allocation4], 1
    %s269 = scalar_lea.sflag [#allocation4], 1
    %270 = vsyncpa %s269, 1

</llo_original>
